<compile_context>
chip_gen: v6e
topology: v6e:2x2x1
jax: 0.10.0
libtpu: 0.0.40
codegen_flags: <defaults>
</compile_context>

<pallas_src>
import functools
import math

import jax
import jax.numpy as jnp
from jax.experimental import pallas as pl
from jax.experimental.pallas import tpu as pltpu


def _round_up(v, m):
    return -(-v // m) * m


def _tpu_generation():
    """(tensorcores_per_chip, vmem_capacity_bytes) with conservative fallbacks."""
    cores, vmem = 1, 64 * 1024 * 1024            # conservative (v7x-sized) default
    try:
        vmem = int(pltpu.get_tpu_info().vmem_capacity_bytes)
    except Exception:
        pass
    try:
        if "v7" in jax.devices()[0].device_kind.lower():
            cores = 2                            # v7x: 2 TensorCores per chip
    except Exception:
        pass
    return cores, vmem


def _block_vmem_bytes(nb, L, Lp, Cin, Wp, Cp, md_bytes, io_bytes):
    """Rough per-grid-step VMEM footprint: double-buffered in/out blocks,
    (double-buffered) resident weights, and the f32 live intermediates."""
    m, mp = nb * L, nb * Lp
    io = 2 * (nb * L * Cin + nb * Cp + nb * Lp * Cp) * io_bytes
    wgt = 2 * ((Cin + 3 * Wp + Cp) * Wp * md_bytes + (2 * Wp + Cp) * 4)
    live = 4 * (m * (Cin + Wp + 3 * Wp) + mp * (3 * Wp + Wp + Cp))
    return io + wgt + live


def _bottleneck_kernel(x_ref, res_ref, w1_ref, b1_ref, w2s_ref, b2_ref,
                       w3_ref, b3_ref, o_ref, *, matmul_dtype):
    # x_ref:   (Nb, L, Cin)  raw (unpadded) channels-last input block
    # res_ref: (Nb, 1, Cp)   lane-padded residual row x[..., 0]
    # w1_ref:  (Cin, Wp)     b1_ref: (1, Wp)      (weights pre-cast to matmul_dtype)
    # w2s_ref: (Wp, 3*Wp)    the three k-taps of dconv2 stacked on the out axis
    # b2_ref:  (1, Wp)
    # w3_ref:  (Wp, Cp)      b3_ref: (1, Cp)
    # o_ref:   (Nb, Lp, Cp)  Lp = round_up(L + 2, 8) (lane/sublane-dense store)
    Nb, L, Cin = x_ref.shape
    Wp = w1_ref.shape[1]
    _, Lp, Cp = o_ref.shape
    md = matmul_dtype

    # (Nb, L, Cin) -> (Nb*L, Cin): free when L is a sublane multiple (wrapper
    # prefers nb*L % 8 == 0).
    x2d = x_ref[...].reshape(Nb * L, Cin)

    # dconv1: 1x1 transposed conv == pointwise channel matmul, then ReLU.
    # Weights are already in `md`; only the activation is cast (f32 accumulation).
    h1 = jnp.dot(x2d.astype(md), w1_ref[...],
                 preferred_element_type=jnp.float32)
    h1 = jnp.maximum(h1 + b1_ref[...], 0.0)                      # (Nb*L, Wp)

    # dconv2: k=3, stride=1, pad=0 transposed conv.
    # One stacked matmul (single MXU push), one sublane zero-pad, two XLU rolls.
    y = jnp.dot(h1.astype(md), w2s_ref[...],
                preferred_element_type=jnp.float32)              # (Nb*L, 3*Wp)
    y = y.reshape(Nb, L, 3 * Wp)
    yp = jnp.concatenate(
        [y, jnp.zeros((Nb, Lp - L, 3 * Wp), jnp.float32)], axis=1)
    yp = yp.reshape(Nb * Lp, 3 * Wp)                             # free: Lp % 8 == 0
    # Tap k contributes to output rows [k, k+L). Because Lp >= L + 2, every row
    # wrapped around by the rolls (including across batch boundaries of the flat
    # view) is an all-zero padding row, so the per-batch shifts stay exact.
    h2 = (yp[:, :Wp]
          + pltpu.roll(yp[:, Wp:2 * Wp], shift=1, axis=0)
          + pltpu.roll(yp[:, 2 * Wp:], shift=2, axis=0))
    h2 = jnp.maximum(h2 + b2_ref[...], 0.0)                      # (Nb*Lp, Wp)

    # dconv3: 1x1 transposed conv, then residual broadcast of x[..., 0] + ReLU.
    h3 = jnp.dot(h2.astype(md), w3_ref[...],
                 preferred_element_type=jnp.float32)
    h3 = (h3 + b3_ref[...]).reshape(Nb, Lp, Cp)
    res = res_ref[...].astype(jnp.float32)                       # (Nb, 1, Cp)
    o_ref[...] = jnp.maximum(h3 + res, 0.0).astype(o_ref.dtype)


def prepare_deconv_bottleneck_params(w1_iok, b1, w2_iok, b2, w3_iok, b3, *,
                                     matmul_dtype=jnp.bfloat16):
    """One-time (init) weight prep: pad channel axes to 128 lanes, stack the three
    dconv2 taps on the output axis, cast matmul operands to `matmul_dtype`.
    ConvTranspose1d weight layout: (in_channels, out_channels, kernel_size)."""
    Cin, W, _ = w1_iok.shape
    Cout = w3_iok.shape[1]
    Wp = _round_up(W, 128)
    Cp = _round_up(Cout, 128)
    md = matmul_dtype
    w1p = jnp.pad(w1_iok[:, :, 0], ((0, 0), (0, Wp - W))).astype(md)          # (Cin, Wp)
    w2s = jnp.concatenate(
        [jnp.pad(w2_iok[:, :, k], ((0, Wp - W), (0, Wp - W))) for k in range(3)],
        axis=1).astype(md)                                                    # (Wp, 3*Wp)
    w3p = jnp.pad(w3_iok[:, :, 0], ((0, Wp - W), (0, Cp - Cout))).astype(md)  # (Wp, Cp)
    b1p = jnp.pad(b1, (0, Wp - W)).reshape(1, Wp).astype(jnp.float32)
    b2p = jnp.pad(b2, (0, Wp - W)).reshape(1, Wp).astype(jnp.float32)
    b3p = jnp.pad(b3, (0, Cp - Cout)).reshape(1, Cp).astype(jnp.float32)
    return dict(w1=w1p, b1=b1p, w2s=w2s, b2=b2p, w3=w3p, b3=b3p,
                matmul_dtype=md, cout=Cout)


def deconv_bottleneck_1d(x_nlc, params, *, target_m=256):
    """x_nlc: (N, L, Cin) channels-last activations; `params` from
    prepare_deconv_bottleneck_params(). Returns (N, L+2, Cout) with Cout == Cin."""
    N, L, Cin = x_nlc.shape
    w1, b1 = params["w1"], params["b1"]
    w2s, b2 = params["w2s"], params["b2"]
    w3, b3 = params["w3"], params["b3"]
    md = params["matmul_dtype"]
    Cout = params["cout"]
    assert Cin == w1.shape[0] and Cin == Cout, \
        "residual broadcast requires inplanes == planes * expansion"
    Wp = w1.shape[1]
    Cp = w3.shape[1]

    Lout = L + 2
    Lp = _round_up(Lout, 8)          # sublane-aligned output length

    cores, vmem_cap = _tpu_generation()
    budget = int(0.7 * vmem_cap)

    # Batch folding: nb batches per grid step so M = nb*L feeds the MXU. Only
    # split into >1 grid block when there is >1 TensorCore to feed (v7x).
    nb = max(1, min(N, max(1, target_m // max(L, 1))))
    if cores > 1 and N >= cores:
        nb = min(nb, -(-N // cores))
    if (L % 8) and nb > 1:           # keep the (Nb, L, C) -> (Nb*L, C) collapse free
        step = 8 // math.gcd(L, 8)
        nb = max(1, (nb // step) * step)
    md_bytes = jnp.dtype(md).itemsize
    io_bytes = jnp.dtype(x_nlc.dtype).itemsize
    while nb > 1 and _block_vmem_bytes(nb, L, Lp, Cin, Wp, Cp,
                                       md_bytes, io_bytes) > budget:
        nb -= 1
    need = _block_vmem_bytes(nb, L, Lp, Cin, Wp, Cp, md_bytes, io_bytes)
    # TODO(synk): add an L-tiling grid axis (2-row input halo) so very long
    # sequences stay inside the VMEM budget even at nb == 1.
    vmem_limit = int(max(min(int(0.9 * vmem_cap), max(2 * need, 32 * 2 ** 20)), need))

    grid_n = -(-N // nb)
    Npad = grid_n * nb
    xb = x_nlc if Npad == N else jnp.pad(x_nlc, ((0, Npad - N), (0, 0), (0, 0)))
    # Tiny lane-padded residual (x[..., 0] broadcast); the full activation itself
    # is NOT channel-padded in HBM anymore.
    res = jnp.pad(x_nlc[:, 0:1, :].astype(jnp.float32),
                  ((0, Npad - N), (0, 0), (0, Cp - Cin)))

    flops = 2 * Npad * (L * Cin * Wp + L * Wp * 3 * Wp + Lp * Wp * Cp)
    bytes_accessed = (io_bytes * (N * L * Cin + Npad * Lp * Cp)
                      + 4 * Npad * Cp
                      + md_bytes * (Cin + 3 * Wp + Cp) * Wp
                      + 4 * (2 * Wp + Cp))
    cost = pl.CostEstimate(flops=flops, transcendentals=0,
                           bytes_accessed=bytes_accessed)

    kernel = functools.partial(_bottleneck_kernel, matmul_dtype=md)

    out = pl.pallas_call(
        kernel,
        out_shape=jax.ShapeDtypeStruct((Npad, Lp, Cp), x_nlc.dtype),
        grid_spec=pltpu.PrefetchScalarGridSpec(
            num_scalar_prefetch=0,
            grid=(grid_n,),
            in_specs=[
                pl.BlockSpec((nb, L, Cin), lambda n: (n, 0, 0)),      # x, raw channels
                pl.BlockSpec((nb, 1, Cp), lambda n: (n, 0, 0)),       # residual row
                pl.BlockSpec((Cin, Wp), lambda n: (0, 0)),            # w1 (pre-cast)
                pl.BlockSpec((1, Wp), lambda n: (0, 0)),              # b1
                pl.BlockSpec((Wp, 3 * Wp), lambda n: (0, 0)),         # w2 stacked taps
                pl.BlockSpec((1, Wp), lambda n: (0, 0)),              # b2
                pl.BlockSpec((Wp, Cp), lambda n: (0, 0)),             # w3
                pl.BlockSpec((1, Cp), lambda n: (0, 0)),              # b3
            ],
            # TODO(synk): add pipeline_mode=pl.Buffered(3) on the x spec only if
            # profiling shows exposed input DMA after the bf16 switch.
            out_specs=pl.BlockSpec((nb, Lp, Cp), lambda n: (n, 0, 0)),
        ),
        compiler_params=pltpu.CompilerParams(
            dimension_semantics=("parallel",),
            vmem_limit_bytes=vmem_limit),
        cost_estimate=cost,
    )(xb, res, w1, b1, w2s, b2, w3, b3)

    # strip batch / length / channel padding
    return out[:N, :Lout, :Cout]


def ref_forward_ncl(x_ncl, w1_iok, b1, w2_iok, b2, w3_iok, b3):
    """Pure-JAX reference in PyTorch's NCL layout with ConvTranspose1d weight layout
    (in_channels, out_channels, kernel_size)."""
    N, Cin, L = x_ncl.shape
    Wd = w1_iok.shape[1]
    h1 = jnp.einsum('nil,io->nol', x_ncl, w1_iok[:, :, 0]) + b1[None, :, None]
    h1 = jnp.maximum(h1, 0.0)
    h2 = jnp.zeros((N, Wd, L + 2), jnp.float32)
    for k in range(3):
        h2 = h2.at[:, :, k:k + L].add(
            jnp.einsum('nil,io->nol', h1, w2_iok[:, :, k]))
    h2 = jnp.maximum(h2 + b2[None, :, None], 0.0)
    h3 = jnp.einsum('nil,io->nol', h2, w3_iok[:, :, 0]) + b3[None, :, None]
    return jnp.maximum(h3 + x_ncl[:, :, 0:1], 0.0)


if __name__ == "__main__":
    # Module config (defaults): stride=1, dilation=1, groups=1, base_width=64,
    # norm_layer=None, dropout=0, upsample=None, expansion=4.
    planes = 4
    inplanes = planes * 4          # 16, must equal planes*expansion for the residual
    width = int(planes * (64 / 64.0)) * 1   # 4
    N, L = 2, 16

    key = jax.random.PRNGKey(0)
    ks = jax.random.split(key, 7)
    # ConvTranspose1d weight layout: (in_channels, out_channels, kernel_size)
    w1_iok = 0.1 * jax.random.normal(ks[0], (inplanes, width, 1), jnp.float32)
    b1 = 0.1 * jax.random.normal(ks[1], (width,), jnp.float32)
    w2_iok = 0.1 * jax.random.normal(ks[2], (width, width, 3), jnp.float32)
    b2 = 0.1 * jax.random.normal(ks[3], (width,), jnp.float32)
    w3_iok = 0.1 * jax.random.normal(ks[4], (width, planes * 4, 1), jnp.float32)
    b3 = 0.1 * jax.random.normal(ks[5], (planes * 4,), jnp.float32)

    x_ncl = jax.random.normal(ks[6], (N, inplanes, L), jnp.float32)   # PyTorch NCL
    x_nlc = jnp.transpose(x_ncl, (0, 2, 1))                           # channels-last

    ref = ref_forward_ncl(x_ncl, w1_iok, b1, w2_iok, b2, w3_iok, b3)

    # --- f32 MXU operands: tight-tolerance validation path.
    p_f32 = prepare_deconv_bottleneck_params(w1_iok, b1, w2_iok, b2, w3_iok, b3,
                                             matmul_dtype=jnp.float32)
    out_f32 = jax.block_until_ready(deconv_bottleneck_1d(x_nlc, p_f32))
    out_f32_ncl = jnp.transpose(out_f32, (0, 2, 1))
    assert out_f32_ncl.shape == (N, planes * 4, L + 2), out_f32_ncl.shape
    assert jnp.allclose(out_f32_ncl, ref, atol=1e-4, rtol=1e-4), float(
        jnp.max(jnp.abs(out_f32_ncl - ref)))

    # --- bf16 MXU operands (default fast path on v5e/v6e/v7x), f32 accumulation.
    p_bf16 = prepare_deconv_bottleneck_params(w1_iok, b1, w2_iok, b2, w3_iok, b3)
    out_bf16 = jax.block_until_ready(deconv_bottleneck_1d(x_nlc, p_bf16))
    out_bf16_ncl = jnp.transpose(out_bf16, (0, 2, 1))
    assert out_bf16_ncl.shape == (N, planes * 4, L + 2), out_bf16_ncl.shape
    assert jnp.allclose(out_bf16_ncl, ref, atol=5e-2, rtol=5e-2), float(
        jnp.max(jnp.abs(out_bf16_ncl - ref)))

    print("KERNEL_OK")
</pallas_src>

<mosaic_0001>
module attributes {stable_mosaic.version = 11 : i64} {
  func.func @_bottleneck_kernel(%arg0: i32, %arg1: memref<2x16x16xf32, #tpu.memory_space<vmem>>, %arg2: memref<2x1x128xf32, #tpu.memory_space<vmem>>, %arg3: memref<16x128xf32, #tpu.memory_space<vmem>>, %arg4: memref<1x128xf32, #tpu.memory_space<vmem>>, %arg5: memref<128x384xf32, #tpu.memory_space<vmem>>, %arg6: memref<1x128xf32, #tpu.memory_space<vmem>>, %arg7: memref<128x128xf32, #tpu.memory_space<vmem>>, %arg8: memref<1x128xf32, #tpu.memory_space<vmem>>, %arg9: memref<2x24x128xf32, #tpu.memory_space<vmem>>) attributes {dimension_semantics = [#tpu.dimension_semantics<parallel>], iteration_bounds = array<i64: 1>, scalar_prefetch = 0 : i64, scratch_operands = 0 : i64, tpu.core_type = #tpu.core_type<tc>, window_params = [{transform_indices = @transform_0, window_bounds = array<i64: 2, 16, 16>}, {transform_indices = @transform_1, window_bounds = array<i64: 2, 1, 128>}, {pipeline_mode = #tpu.pipeline_mode<synchronous>, transform_indices = @transform_2, window_bounds = array<i64: 16, 128>}, {pipeline_mode = #tpu.pipeline_mode<synchronous>, transform_indices = @transform_3, window_bounds = array<i64: 1, 128>}, {pipeline_mode = #tpu.pipeline_mode<synchronous>, transform_indices = @transform_4, window_bounds = array<i64: 128, 384>}, {pipeline_mode = #tpu.pipeline_mode<synchronous>, transform_indices = @transform_5, window_bounds = array<i64: 1, 128>}, {pipeline_mode = #tpu.pipeline_mode<synchronous>, transform_indices = @transform_6, window_bounds = array<i64: 128, 128>}, {pipeline_mode = #tpu.pipeline_mode<synchronous>, transform_indices = @transform_7, window_bounds = array<i64: 1, 128>}, {transform_indices = @transform_8, window_bounds = array<i64: 2, 24, 128>}]} {
    %c0 = arith.constant 0 : index
    %c0_0 = arith.constant 0 : index
    %c0_1 = arith.constant 0 : index
    %0 = vector.load %arg1[%c0, %c0_0, %c0_1] : memref<2x16x16xf32, #tpu.memory_space<vmem>>, vector<2x16x16xf32>
    %1 = vector.shape_cast %0 : vector<2x16x16xf32> to vector<32x16xf32>
    %c0_2 = arith.constant 0 : index
    %c0_3 = arith.constant 0 : index
    %2 = vector.load %arg3[%c0_2, %c0_3] : memref<16x128xf32, #tpu.memory_space<vmem>>, vector<16x128xf32>
    %cst = arith.constant dense<0.000000e+00> : vector<32x128xf32>
    %3 = tpu.matmul %1, %2, %cst {dimension_numbers = #tpu.dot_dimension_numbers<[1], [0], [0], [1], [0, 0, 1, 1], [], []>} : vector<32x16xf32>, vector<16x128xf32>, vector<32x128xf32> -> vector<32x128xf32>
    %c0_4 = arith.constant 0 : index
    %c0_5 = arith.constant 0 : index
    %4 = vector.load %arg4[%c0_4, %c0_5] : memref<1x128xf32, #tpu.memory_space<vmem>>, vector<1x128xf32>
    %5 = vector.broadcast %4 : vector<1x128xf32> to vector<32x128xf32>
    %6 = arith.addf %3, %5 : vector<32x128xf32>
    %cst_6 = arith.constant 0.000000e+00 : f32
    %7 = vector.broadcast %cst_6 : f32 to vector<32x128xf32>
    %8 = arith.maximumf %6, %7 : vector<32x128xf32>
    %c0_7 = arith.constant 0 : index
    %c0_8 = arith.constant 0 : index
    %9 = vector.load %arg5[%c0_7, %c0_8] : memref<128x384xf32, #tpu.memory_space<vmem>>, vector<128x384xf32>
    %cst_9 = arith.constant dense<0.000000e+00> : vector<32x384xf32>
    %10 = tpu.matmul %8, %9, %cst_9 {dimension_numbers = #tpu.dot_dimension_numbers<[1], [0], [0], [1], [0, 0, 1, 1], [], []>} : vector<32x128xf32>, vector<128x384xf32>, vector<32x384xf32> -> vector<32x384xf32>
    %11 = vector.shape_cast %10 : vector<32x384xf32> to vector<2x16x384xf32>
    %cst_10 = arith.constant 0.000000e+00 : f32
    %12 = vector.broadcast %cst_10 : f32 to vector<2x8x384xf32>
    %13 = tpu.concatenate %11, %12 in 1 : vector<2x16x384xf32>, vector<2x8x384xf32> -> vector<2x24x384xf32>
    %14 = vector.shape_cast %13 : vector<2x24x384xf32> to vector<48x384xf32>
    %15 = vector.extract_strided_slice %14 {offsets = [0, 0], sizes = [48, 128], strides = [1, 1]} : vector<48x384xf32> to vector<48x128xf32>
    %16 = vector.extract_strided_slice %14 {offsets = [0, 128], sizes = [48, 128], strides = [1, 1]} : vector<48x384xf32> to vector<48x128xf32>
    %c1_i32 = arith.constant 1 : i32
    %17 = tpu.dynamic_rotate %16 by %c1_i32 dim 0 : vector<48x128xf32>, i32 -> vector<48x128xf32>
    %18 = arith.addf %15, %17 : vector<48x128xf32>
    %19 = vector.extract_strided_slice %14 {offsets = [0, 256], sizes = [48, 128], strides = [1, 1]} : vector<48x384xf32> to vector<48x128xf32>
    %c2_i32 = arith.constant 2 : i32
    %20 = tpu.dynamic_rotate %19 by %c2_i32 dim 0 : vector<48x128xf32>, i32 -> vector<48x128xf32>
    %21 = arith.addf %18, %20 : vector<48x128xf32>
    %c0_11 = arith.constant 0 : index
    %c0_12 = arith.constant 0 : index
    %22 = vector.load %arg6[%c0_11, %c0_12] : memref<1x128xf32, #tpu.memory_space<vmem>>, vector<1x128xf32>
    %23 = vector.broadcast %22 : vector<1x128xf32> to vector<48x128xf32>
    %24 = arith.addf %21, %23 : vector<48x128xf32>
    %cst_13 = arith.constant 0.000000e+00 : f32
    %25 = vector.broadcast %cst_13 : f32 to vector<48x128xf32>
    %26 = arith.maximumf %24, %25 : vector<48x128xf32>
    %c0_14 = arith.constant 0 : index
    %c0_15 = arith.constant 0 : index
    %27 = vector.load %arg7[%c0_14, %c0_15] : memref<128x128xf32, #tpu.memory_space<vmem>>, vector<128x128xf32>
    %cst_16 = arith.constant dense<0.000000e+00> : vector<48x128xf32>
    %28 = tpu.matmul %26, %27, %cst_16 {dimension_numbers = #tpu.dot_dimension_numbers<[1], [0], [0], [1], [0, 0, 1, 1], [], []>} : vector<48x128xf32>, vector<128x128xf32>, vector<48x128xf32> -> vector<48x128xf32>
    %c0_17 = arith.constant 0 : index
    %c0_18 = arith.constant 0 : index
    %29 = vector.load %arg8[%c0_17, %c0_18] : memref<1x128xf32, #tpu.memory_space<vmem>>, vector<1x128xf32>
    %30 = vector.broadcast %29 : vector<1x128xf32> to vector<48x128xf32>
    %31 = arith.addf %28, %30 : vector<48x128xf32>
    %32 = vector.shape_cast %31 : vector<48x128xf32> to vector<2x24x128xf32>
    %c0_19 = arith.constant 0 : index
    %c0_20 = arith.constant 0 : index
    %c0_21 = arith.constant 0 : index
    %33 = vector.load %arg2[%c0_19, %c0_20, %c0_21] : memref<2x1x128xf32, #tpu.memory_space<vmem>>, vector<2x1x128xf32>
    %34 = vector.broadcast %33 : vector<2x1x128xf32> to vector<2x24x128xf32>
    %35 = arith.addf %32, %34 : vector<2x24x128xf32>
    %cst_22 = arith.constant 0.000000e+00 : f32
    %36 = vector.broadcast %cst_22 : f32 to vector<2x24x128xf32>
    %37 = arith.maximumf %35, %36 : vector<2x24x128xf32>
    %c0_23 = arith.constant 0 : index
    %c0_24 = arith.constant 0 : index
    %c0_25 = arith.constant 0 : index
    %38 = vector.load %arg9[%c0_23, %c0_24, %c0_25] : memref<2x24x128xf32, #tpu.memory_space<vmem>>, vector<2x24x128xf32>
    tpu.vector_store %arg9[%c0_23, %c0_24, %c0_25], %37 {strides = array<i32>} : memref<2x24x128xf32, #tpu.memory_space<vmem>>, vector<2x24x128xf32>,
    return
  }
  func.func @transform_0(%arg0: i32) -> (i32, i32, i32) {
    %c0_i32 = arith.constant 0 : i32
    %c0_i32_0 = arith.constant 0 : i32
    %c0_i32_1 = arith.constant 0 : i32
    return %arg0, %c0_i32, %c0_i32_0 : i32, i32, i32
  }
  func.func @transform_1(%arg0: i32) -> (i32, i32, i32) {
    %c0_i32 = arith.constant 0 : i32
    %c0_i32_0 = arith.constant 0 : i32
    %c0_i32_1 = arith.constant 0 : i32
    return %arg0, %c0_i32, %c0_i32_0 : i32, i32, i32
  }
  func.func @transform_2(%arg0: i32) -> (i32, i32) {
    %c0_i32 = arith.constant 0 : i32
    %c0_i32_0 = arith.constant 0 : i32
    %c0_i32_1 = arith.constant 0 : i32
    return %c0_i32, %c0_i32_0 : i32, i32
  }
  func.func @transform_3(%arg0: i32) -> (i32, i32) {
    %c0_i32 = arith.constant 0 : i32
    %c0_i32_0 = arith.constant 0 : i32
    %c0_i32_1 = arith.constant 0 : i32
    return %c0_i32, %c0_i32_0 : i32, i32
  }
  func.func @transform_4(%arg0: i32) -> (i32, i32) {
    %c0_i32 = arith.constant 0 : i32
    %c0_i32_0 = arith.constant 0 : i32
    %c0_i32_1 = arith.constant 0 : i32
    return %c0_i32, %c0_i32_0 : i32, i32
  }
  func.func @transform_5(%arg0: i32) -> (i32, i32) {
    %c0_i32 = arith.constant 0 : i32
    %c0_i32_0 = arith.constant 0 : i32
    %c0_i32_1 = arith.constant 0 : i32
    return %c0_i32, %c0_i32_0 : i32, i32
  }
  func.func @transform_6(%arg0: i32) -> (i32, i32) {
    %c0_i32 = arith.constant 0 : i32
    %c0_i32_0 = arith.constant 0 : i32
    %c0_i32_1 = arith.constant 0 : i32
    return %c0_i32, %c0_i32_0 : i32, i32
  }
  func.func @transform_7(%arg0: i32) -> (i32, i32) {
    %c0_i32 = arith.constant 0 : i32
    %c0_i32_0 = arith.constant 0 : i32
    %c0_i32_1 = arith.constant 0 : i32
    return %c0_i32, %c0_i32_0 : i32, i32
  }
  func.func @transform_8(%arg0: i32) -> (i32, i32, i32) {
    %c0_i32 = arith.constant 0 : i32
    %c0_i32_0 = arith.constant 0 : i32
    %c0_i32_1 = arith.constant 0 : i32
    return %arg0, %c0_i32, %c0_i32_0 : i32, i32, i32
  }
}

</mosaic_0001>

<llo_original>
// kernel: tpu_custom_call.1
$region0: #{tpu_custom_call.1}
  #allocation0 [shape = 'u32[]', space=smem, size = 0x4, offset = 0x4, fixed_abs, tag = 'smem constant byte address 0x4 - core index']
  #allocation1 [shape = 'u32[144,128]{1,0:T(1,128)}', space=vmem, size = 0x12000, scoped, tag = 'internal scratch']
  %s0 = inlined_call_operand.hbm [shape: f32[2,16,16], index: 0, kind: input, shape index: {}]
  %s1 = inlined_call_operand.hbm [shape: f32[2,1,128], index: 1, kind: input, shape index: {}]
  %s2 = inlined_call_operand.hbm [shape: f32[16,128], index: 2, kind: input, shape index: {}]
  %s3 = inlined_call_operand.vmem [shape: f32[1,128], index: 3, kind: input, shape index: {}]
  %s4 = inlined_call_operand.hbm [shape: f32[128,384], index: 4, kind: input, shape index: {}]
  %s5 = inlined_call_operand.vmem [shape: f32[1,128], index: 5, kind: input, shape index: {}]
  %s6 = inlined_call_operand.hbm [shape: f32[128,128], index: 6, kind: input, shape index: {}]
  %s7 = inlined_call_operand.vmem [shape: f32[1,128], index: 7, kind: input, shape index: {}]
  %s8 = inlined_call_operand.hbm [shape: f32[2,24,128], index: 8, kind: output, shape index: {}]
  %s9 = sld [smem:[#allocation0]]
  $region62: #{tpu_custom_call.1} parent=0
    _
  %s11 = ssub.s32 1, %s9
  %s12 = scalar_select 0, %s11, %s9
  $region1: #{tpu_custom_call.1} parent=0
    #allocation2 [shape = 'u8[16384]{0}', space=vmem, size = 0x4000, scoped, tag = 'input window, operand 0, single buffered']
    #allocation3 [shape = 's32[1]{0}', space=sflag, size = 0x4, scoped, tag = 'scoped memory for tpu_custom_call.1']
    #allocation4 [shape = 's32[1]{0}', space=sflag, size = 0x4, scoped, tag = 'scoped memory for tpu_custom_call.1']
    #allocation5 [shape = 'u8[1024]{0}', space=vmem, size = 0x400, scoped, tag = 'input window, operand 1, single buffered']
    #allocation6 [shape = 's32[1]{0}', space=sflag, size = 0x4, scoped, tag = 'scoped memory for tpu_custom_call.1']
    #allocation7 [shape = 'u8[8192]{0}', space=vmem, size = 0x2000, scoped, tag = 'input window, operand 2, single buffered']
    #allocation8 [shape = 'u8[196608]{0}', space=vmem, size = 0x30000, scoped, tag = 'input window, operand 4, single buffered']
    #allocation9 [shape = 's32[1]{0}', space=sflag, size = 0x4, scoped, tag = 'scoped memory for tpu_custom_call.1']
    #allocation10 [shape = 'u8[65536]{0}', space=vmem, size = 0x10000, scoped, tag = 'input window, operand 6, single buffered']
    #allocation11 [shape = 'u8[24576]{0}', space=vmem, size = 0x6000, scoped, tag = 'output window, operand 0, single buffered']
    %13 = vsyncpa [#allocation3], 0
    %14 = vsyncpa [#allocation6], 0
    %15 = vsyncpa [#allocation9], 0
    %16 = vsyncpa [#allocation4], 0
    // Predicated region
    $region2: #{tpu_custom_call.1} parent=1 // pred_check
      _
    $region3: #{tpu_custom_call.1} parent=1 // pred_check_branch
      %18 = sbr.rel (0) target = $region5
    $region4: #{tpu_custom_call.1} parent=1 // pred_region
      %s20 = ssub.s32 512, 512
      %21 = vsyncadd [#allocation3], %s20
      %s22 = sshll.u32 [#allocation2], 4
      %s23 = int_to_ptr.vmem [resolvable:$true] %s22
      %28 = dma.hbm_to_vmem [thread:$0]  %s0, 512, %s23, [#allocation3], 128, 128, 8
    $region5: #{tpu_custom_call.1} parent=1 // pred_fallthru
      _
    // Predicated region
    $region6: #{tpu_custom_call.1} parent=1 // pred_check
      _
    $region7: #{tpu_custom_call.1} parent=1 // pred_check_branch
      %30 = sbr.rel (0) target = $region9
    $region8: #{tpu_custom_call.1} parent=1 // pred_region
      %s32 = ssub.s32 32, 32
      %33 = vsyncadd [#allocation6], %s32
      %s34 = sshll.u32 [#allocation5], 4
      %s35 = int_to_ptr.vmem [resolvable:$true] %s34
      %40 = dma.hbm_to_vmem [thread:$0]  %s1, 32, %s35, [#allocation6], 16, 16, 1
    $region9: #{tpu_custom_call.1} parent=1 // pred_fallthru
      _
    // Predicated region
    $region10: #{tpu_custom_call.1} parent=1 // pred_check
      _
    $region11: #{tpu_custom_call.1} parent=1 // pred_check_branch
      %42 = sbr.rel (0) target = $region13
    $region12: #{tpu_custom_call.1} parent=1 // pred_region
      %s44 = ssub.s32 256, 256
      %45 = vsyncadd [#allocation6], %s44
      %s46 = sshll.u32 [#allocation7], 4
      %s47 = int_to_ptr.vmem [resolvable:$true] %s46
      %52 = dma.hbm_to_vmem [thread:$0]  %s2, 256, %s47, [#allocation6], 128, 128, 8
    $region13: #{tpu_custom_call.1} parent=1 // pred_fallthru
      _
    // Predicated region
    $region14: #{tpu_custom_call.1} parent=1 // pred_check
      _
    $region15: #{tpu_custom_call.1} parent=1 // pred_check_branch
      %54 = sbr.rel (0) target = $region17
    $region16: #{tpu_custom_call.1} parent=1 // pred_region
      _
    $region17: #{tpu_custom_call.1} parent=1 // pred_fallthru
      _
    // Predicated region
    $region18: #{tpu_custom_call.1} parent=1 // pred_check
      _
    $region19: #{tpu_custom_call.1} parent=1 // pred_check_branch
      %56 = sbr.rel (0) target = $region21
    $region20: #{tpu_custom_call.1} parent=1 // pred_region
      %s58 = ssub.s32 6144, 6144
      %59 = vsyncadd [#allocation9], %s58
      %s60 = sshll.u32 [#allocation8], 4
      %s61 = int_to_ptr.vmem [resolvable:$true] %s60
      %66 = dma.hbm_to_vmem [thread:$0]  %s4, 6144, %s61, [#allocation9], 384, 384, 24
    $region21: #{tpu_custom_call.1} parent=1 // pred_fallthru
      _
    // Predicated region
    $region22: #{tpu_custom_call.1} parent=1 // pred_check
      _
    $region23: #{tpu_custom_call.1} parent=1 // pred_check_branch
      %68 = sbr.rel (0) target = $region25
    $region24: #{tpu_custom_call.1} parent=1 // pred_region
      _
    $region25: #{tpu_custom_call.1} parent=1 // pred_fallthru
      _
    // Predicated region
    $region26: #{tpu_custom_call.1} parent=1 // pred_check
      _
    $region27: #{tpu_custom_call.1} parent=1 // pred_check_branch
      %70 = sbr.rel (0) target = $region29
    $region28: #{tpu_custom_call.1} parent=1 // pred_region
      %s72 = ssub.s32 2048, 2048
      %73 = vsyncadd [#allocation9], %s72
      %s74 = sshll.u32 [#allocation10], 4
      %s75 = int_to_ptr.vmem [resolvable:$true] %s74
      %80 = dma.hbm_to_vmem [thread:$0]  %s6, 2048, %s75, [#allocation9], 128, 128, 8
    $region29: #{tpu_custom_call.1} parent=1 // pred_fallthru
      _
    // Predicated region
    $region30: #{tpu_custom_call.1} parent=1 // pred_check
      _
    $region31: #{tpu_custom_call.1} parent=1 // pred_check_branch
      %82 = sbr.rel (0) target = $region33
    $region32: #{tpu_custom_call.1} parent=1 // pred_region
      _
    $region33: #{tpu_custom_call.1} parent=1 // pred_fallthru
      _
    // Predicated region
    $region34: #{tpu_custom_call.1} parent=1 // pred_check
      _
    $region35: #{tpu_custom_call.1} parent=1 // pred_check_branch
      %84 = sbr.rel (0) target = $region37
    $region36: #{tpu_custom_call.1} parent=1 // pred_region
      %85 = dma.done [#allocation3], 512
    $region37: #{tpu_custom_call.1} parent=1 // pred_fallthru
      _
    // Predicated region
    $region38: #{tpu_custom_call.1} parent=1 // pred_check
      _
    $region39: #{tpu_custom_call.1} parent=1 // pred_check_branch
      %87 = sbr.rel (0) target = $region41
    $region40: #{tpu_custom_call.1} parent=1 // pred_region
      %88 = dma.done [#allocation6], 32
    $region41: #{tpu_custom_call.1} parent=1 // pred_fallthru
      _
    // Predicated region
    $region42: #{tpu_custom_call.1} parent=1 // pred_check
      _
    $region43: #{tpu_custom_call.1} parent=1 // pred_check_branch
      %90 = sbr.rel (0) target = $region45
    $region44: #{tpu_custom_call.1} parent=1 // pred_region
      %91 = dma.done [#allocation6], 256
    $region45: #{tpu_custom_call.1} parent=1 // pred_fallthru
      _
    // Predicated region
    $region46: #{tpu_custom_call.1} parent=1 // pred_check
      _
    $region47: #{tpu_custom_call.1} parent=1 // pred_check_branch
      %93 = sbr.rel (0) target = $region49
    $region48: #{tpu_custom_call.1} parent=1 // pred_region
      %94 = dma.done [#allocation9], 6144
    $region49: #{tpu_custom_call.1} parent=1 // pred_fallthru
      _
    // Predicated region
    $region50: #{tpu_custom_call.1} parent=1 // pred_check
      _
    $region51: #{tpu_custom_call.1} parent=1 // pred_check_branch
      %96 = sbr.rel (0) target = $region53
    $region52: #{tpu_custom_call.1} parent=1 // pred_region
      %97 = dma.done [#allocation9], 2048
    $region53: #{tpu_custom_call.1} parent=1 // pred_fallthru
      _
    %v98 = vld [vmem:[#allocation2] sm:$0xff]
    %v99 = vld [vmem:[#allocation2 + $0x8] sm:$0xff]
    %v100 = vld [vmem:[#allocation2 + $0x10] sm:$0xff]
    %v101 = vld [vmem:[#allocation2 + $0x18] sm:$0xff]
    %v102 = vld [vmem:[#allocation7] sm:$0xff]
    %v103 = vld [vmem:[#allocation7 + $0x8] sm:$0xff]
    %v104 = vld [vmem:[%s3] sm:$0x1]
    %v106 = vlaneseq
    %v107 = vshrl.u32 %v106, 7
    %v108 = vsub.s32 0, %v107
    %v109 = vrot.slane %v104, %v108
    %vm111 = vcmask 130048
    %v113 = vsel %vm111, %v98, 0
    %v116 = vsel %vm111, %v99, 0
    %v119 = vsel %vm111, %v100, 0
    %v122 = vsel %vm111, %v101, 0
    %124 = vmatprep.subr.mxu0 0.0
    %125 = vmatpush1.msra.mxu0 0.0
    %126 = vmatprep.subr.mxu0 0.0
    %127 = vmatpush1.msra.mxu0 0.0
    %128 = vmatprep.subr.mxu0 0.0
    %129 = vmatpush1.msra.mxu0 0.0
    %130 = vmatprep.subr.mxu0 0.0
    %131 = vmatpush1.msra.mxu0 0.0
    %132 = vmatprep.subr.mxu0 0.0
    %133 = vmatpush1.msra.mxu0 0.0
    %134 = vmatprep.subr.mxu0 0.0
    %135 = vmatpush1.msra.mxu0 0.0
    %136 = vmatprep.subr.mxu0 0.0
    %137 = vmatpush1.msra.mxu0 0.0
    %138 = vmatprep.subr.mxu0 0.0
    %139 = vmatpush1.msra.mxu0 0.0
    %140 = vmatprep.subr.mxu0 0.0
    %141 = vmatpush1.msra.mxu0 0.0
    %142 = vmatprep.subr.mxu0 0.0
    %143 = vmatpush1.msra.mxu0 0.0
    %144 = vmatprep.subr.mxu0 0.0
    %145 = vmatpush1.msra.mxu0 0.0
    %146 = vmatprep.subr.mxu0 0.0
    %147 = vmatpush1.msra.mxu0 0.0
    %148 = vmatprep.subr.mxu0 0.0
    %149 = vmatpush1.msra.mxu0 0.0
    %150 = vmatprep.subr.mxu0 0.0
    %151 = vmatpush1.msra.mxu0 0.0
    %152 = vmatprep.subr.mxu0 0.0
    %153 = vmatpush1.msra.mxu0 %v103
    %154 = vmatprep.subr.mxu0 0.0
    %155 = vmatpush1.msra.mxu0 %v102
    %156 = vmatprep.subr.mxu0 0.0
    %157 = vmatpush2.msra.mxu0 0.0
    %158 = vmatprep.subr.mxu0 0.0
    %159 = vmatpush2.msra.mxu0 0.0
    %160 = vmatprep.subr.mxu0 0.0
    %161 = vmatpush2.msra.mxu0 0.0
    %162 = vmatprep.subr.mxu0 0.0
    %163 = vmatpush2.msra.mxu0 0.0
    %164 = vmatprep.subr.mxu0 0.0
    %165 = vmatpush2.msra.mxu0 0.0
    %166 = vmatprep.subr.mxu0 0.0
    %167 = vmatpush2.msra.mxu0 0.0
    %168 = vmatprep.subr.mxu0 0.0
    %169 = vmatpush2.msra.mxu0 0.0
    %170 = vmatprep.subr.mxu0 0.0
    %171 = vmatpush2.msra.mxu0 0.0
    %172 = vmatprep.subr.mxu0 0.0
    %173 = vmatpush2.msra.mxu0 0.0
    %174 = vmatprep.subr.mxu0 0.0
    %175 = vmatpush2.msra.mxu0 0.0
    %176 = vmatprep.subr.mxu0 0.0
    %177 = vmatpush2.msra.mxu0 0.0
    %178 = vmatprep.subr.mxu0 0.0
    %179 = vmatpush2.msra.mxu0 0.0
    %180 = vmatprep.subr.mxu0 0.0
    %181 = vmatpush2.msra.mxu0 0.0
    %182 = vmatprep.subr.mxu0 0.0
    %183 = vmatpush2.msra.mxu0 0.0
    %184 = vmatprep.subr.mxu0 0.0
    %185 = vmatpush2.msra.mxu0 0.0
    %186 = vmatprep.subr.mxu0 0.0
    %187 = vmatpush2.msra.mxu0 0.0
    %188 = vmatprep.mubr.f32.mxu0 0.0
    %189 = vmatmul.mubr.f32.gmra.mxu0 %v113
    %v190 = vpop.f32.mrf.mxu0
    %v191 = vadd.f32 %v109, %v190
    %v192 = vpop.f32.mrf.mxu0
    %193 = vmatprep.mubr.f32.mxu0 0.0
    %194 = vmatmul.mubr.f32.gmra.mxu0 %v116
    %v195 = vpop.f32.mrf.mxu0
    %v196 = vadd.f32 %v109, %v195
    %v197 = vpop.f32.mrf.mxu0
    %198 = vmatprep.mubr.f32.mxu0 0.0
    %199 = vmatmul.mubr.f32.gmra.mxu0 %v119
    %v200 = vpop.f32.mrf.mxu0
    %v201 = vadd.f32 %v109, %v200
    %v202 = vpop.f32.mrf.mxu0
    %203 = vmatprep.mubr.f32.mxu0 0.0
    %204 = vmatmul.mubr.f32.gmra.mxu0 %v122
    %v205 = vpop.f32.mrf.mxu0
    %v206 = vadd.f32 %v109, %v205
    %v207 = vpop.f32.mrf.mxu0
    %208 = vdwg.mxu0
    %v209 = vmax.f32 %v191, 0.0
    %v210 = vmax.f32 %v196, 0.0
    %v211 = vmax.f32 %v201, 0.0
    %v212 = vmax.f32 %v206, 0.0
    %v213 = vld [vmem:[#allocation8] sm:$0xff]
    %v214 = vld [vmem:[#allocation8 + $0x8] sm:$0xff]
    %v215 = vld [vmem:[#allocation8 + $0x10] sm:$0xff]
    %v216 = vld [vmem:[#allocation8 + $0x18] sm:$0xff]
    %v217 = vld [vmem:[#allocation8 + $0x20] sm:$0xff]
    %v218 = vld [vmem:[#allocation8 + $0x28] sm:$0xff]
    %v219 = vld [vmem:[#allocation8 + $0x30] sm:$0xff]
    %v220 = vld [vmem:[#allocation8 + $0x38] sm:$0xff]
    %v221 = vld [vmem:[#allocation8 + $0x40] sm:$0xff]
    %v222 = vld [vmem:[#allocation8 + $0x48] sm:$0xff]
    %v223 = vld [vmem:[#allocation8 + $0x50] sm:$0xff]
    %v224 = vld [vmem:[#allocation8 + $0x58] sm:$0xff]
    %v225 = vld [vmem:[#allocation8 + $0x60] sm:$0xff]
    %v226 = vld [vmem:[#allocation8 + $0x68] sm:$0xff]
    %v227 = vld [vmem:[#allocation8 + $0x70] sm:$0xff]
    %v228 = vld [vmem:[#allocation8 + $0x78] sm:$0xff]
    %v229 = vld [vmem:[#allocation8 + $0x80] sm:$0xff]
    %v230 = vld [vmem:[#allocation8 + $0x88] sm:$0xff]
    %v231 = vld [vmem:[#allocation8 + $0x90] sm:$0xff]
    %v232 = vld [vmem:[#allocation8 + $0x98] sm:$0xff]
    %v233 = vld [vmem:[#allocation8 + $0xa0] sm:$0xff]
    %v234 = vld [vmem:[#allocation8 + $0xa8] sm:$0xff]
    %v235 = vld [vmem:[#allocation8 + $0xb0] sm:$0xff]
    %v236 = vld [vmem:[#allocation8 + $0xb8] sm:$0xff]
    %v237 = vld [vmem:[#allocation8 + $0xc0] sm:$0xff]
    %v238 = vld [vmem:[#allocation8 + $0xc8] sm:$0xff]
    %v239 = vld [vmem:[#allocation8 + $0xd0] sm:$0xff]
    %v240 = vld [vmem:[#allocation8 + $0xd8] sm:$0xff]
    %v241 = vld [vmem:[#allocation8 + $0xe0] sm:$0xff]
    %v242 = vld [vmem:[#allocation8 + $0xe8] sm:$0xff]
    %v243 = vld [vmem:[#allocation8 + $0xf0] sm:$0xff]
    %v244 = vld [vmem:[#allocation8 + $0xf8] sm:$0xff]
    %v245 = vld [vmem:[#allocation8 + $0x100] sm:$0xff]
    %v246 = vld [vmem:[#allocation8 + $0x108] sm:$0xff]
    %v247 = vld [vmem:[#allocation8 + $0x110] sm:$0xff]
    %v248 = vld [vmem:[#allocation8 + $0x118] sm:$0xff]
    %v249 = vld [vmem:[#allocation8 + $0x120] sm:$0xff]
    %v250 = vld [vmem:[#allocation8 + $0x128] sm:$0xff]
    %v251 = vld [vmem:[#allocation8 + $0x130] sm:$0xff]
    %v252 = vld [vmem:[#allocation8 + $0x138] sm:$0xff]
    %v253 = vld [vmem:[#allocation8 + $0x140] sm:$0xff]
    %v254 = vld [vmem:[#allocation8 + $0x148] sm:$0xff]
    %v255 = vld [vmem:[#allocation8 + $0x150] sm:$0xff]
    %v256 = vld [vmem:[#allocation8 + $0x158] sm:$0xff]
    %v257 = vld [vmem:[#allocation8 + $0x160] sm:$0xff]
    %v258 = vld [vmem:[#allocation8 + $0x168] sm:$0xff]
    %v259 = vld [vmem:[#allocation8 + $0x170] sm:$0xff]
    %v260 = vld [vmem:[#allocation8 + $0x178] sm:$0xff]
    %261 = vmatprep.subr.mxu0 %v259
    %262 = vmatpush1.msra.mxu0 %v258
    %263 = vmatprep.subr.mxu0 %v256
    %264 = vmatpush1.msra.mxu0 %v255
    %265 = vmatprep.subr.mxu0 %v253
    %266 = vmatpush1.msra.mxu0 %v252
    %267 = vmatprep.subr.mxu0 %v250
    %268 = vmatpush1.msra.mxu0 %v249
    %269 = vmatprep.subr.mxu0 %v247
    %270 = vmatpush1.msra.mxu0 %v246
    %271 = vmatprep.subr.mxu0 %v244
    %272 = vmatpush1.msra.mxu0 %v243
    %273 = vmatprep.subr.mxu0 %v241
    %274 = vmatpush1.msra.mxu0 %v240
    %275 = vmatprep.subr.mxu0 %v238
    %276 = vmatpush1.msra.mxu0 %v237
    %277 = vmatprep.subr.mxu0 %v235
    %278 = vmatpush1.msra.mxu0 %v234
    %279 = vmatprep.subr.mxu0 %v232
    %280 = vmatpush1.msra.mxu0 %v231
    %281 = vmatprep.subr.mxu0 %v229
    %282 = vmatpush1.msra.mxu0 %v228
    %283 = vmatprep.subr.mxu0 %v226
    %284 = vmatpush1.msra.mxu0 %v225
    %285 = vmatprep.subr.mxu0 %v223
    %286 = vmatpush1.msra.mxu0 %v222
    %287 = vmatprep.subr.mxu0 %v220
    %288 = vmatpush1.msra.mxu0 %v219
    %289 = vmatprep.subr.mxu0 %v217
    %290 = vmatpush1.msra.mxu0 %v216
    %291 = vmatprep.subr.mxu0 %v214
    %292 = vmatpush1.msra.mxu0 %v213
    %293 = vmatprep.subr.mxu0 0.0
    %294 = vmatpush2.msra.mxu0 0.0
    %295 = vmatprep.subr.mxu0 0.0
    %296 = vmatpush2.msra.mxu0 0.0
    %297 = vmatprep.subr.mxu0 0.0
    %298 = vmatpush2.msra.mxu0 0.0
    %299 = vmatprep.subr.mxu0 0.0
    %300 = vmatpush2.msra.mxu0 0.0
    %301 = vmatprep.subr.mxu0 0.0
    %302 = vmatpush2.msra.mxu0 0.0
    %303 = vmatprep.subr.mxu0 0.0
    %304 = vmatpush2.msra.mxu0 0.0
    %305 = vmatprep.subr.mxu0 0.0
    %306 = vmatpush2.msra.mxu0 0.0
    %307 = vmatprep.subr.mxu0 0.0
    %308 = vmatpush2.msra.mxu0 0.0
    %309 = vmatprep.subr.mxu0 0.0
    %310 = vmatpush2.msra.mxu0 0.0
    %311 = vmatprep.subr.mxu0 0.0
    %312 = vmatpush2.msra.mxu0 0.0
    %313 = vmatprep.subr.mxu0 0.0
    %314 = vmatpush2.msra.mxu0 0.0
    %315 = vmatprep.subr.mxu0 0.0
    %316 = vmatpush2.msra.mxu0 0.0
    %317 = vmatprep.subr.mxu0 0.0
    %318 = vmatpush2.msra.mxu0 0.0
    %319 = vmatprep.subr.mxu0 0.0
    %320 = vmatpush2.msra.mxu0 0.0
    %321 = vmatprep.subr.mxu0 0.0
    %322 = vmatpush2.msra.mxu0 0.0
    %323 = vmatprep.subr.mxu0 0.0
    %324 = vmatpush2.msra.mxu0 0.0
    %325 = vmatprep.mubr.f32.mxu0 0.0
    %326 = vmatmul.mubr.f32.gmra.mxu0 %v209
    %v327 = vpop.f32.mrf.mxu0
    %v328 = vadd.f32 0.0, %v327
    %v329 = vpop.f32.mrf.mxu0
    %v330 = vadd.f32 0.0, %v329
    %331 = vmatprep.mubr.f32.mxu0 0.0
    %332 = vmatmul.mubr.f32.gmra.mxu0 %v210
    %v333 = vpop.f32.mrf.mxu0
    %v334 = vadd.f32 0.0, %v333
    %v335 = vpop.f32.mrf.mxu0
    %v336 = vadd.f32 0.0, %v335
    %337 = vmatprep.mubr.f32.mxu0 0.0
    %338 = vmatmul.mubr.f32.gmra.mxu0 %v211
    %v339 = vpop.f32.mrf.mxu0
    %v340 = vadd.f32 0.0, %v339
    %v341 = vpop.f32.mrf.mxu0
    %v342 = vadd.f32 0.0, %v341
    %343 = vmatprep.mubr.f32.mxu0 0.0
    %344 = vmatmul.mubr.f32.gmra.mxu0 %v212
    %v345 = vpop.f32.mrf.mxu0
    %v346 = vadd.f32 0.0, %v345
    %v347 = vpop.f32.mrf.mxu0
    %v348 = vadd.f32 0.0, %v347
    %349 = vdwg.mxu0
    %350 = vmatprep.subr.mxu0 0.0
    %351 = vmatpush1.msra.mxu0 %v260
    %352 = vmatprep.subr.mxu0 0.0
    %353 = vmatpush1.msra.mxu0 %v257
    %354 = vmatprep.subr.mxu0 0.0
    %355 = vmatpush1.msra.mxu0 %v254
    %356 = vmatprep.subr.mxu0 0.0
    %357 = vmatpush1.msra.mxu0 %v251
    %358 = vmatprep.subr.mxu0 0.0
    %359 = vmatpush1.msra.mxu0 %v248
    %360 = vmatprep.subr.mxu0 0.0
    %361 = vmatpush1.msra.mxu0 %v245
    %362 = vmatprep.subr.mxu0 0.0
    %363 = vmatpush1.msra.mxu0 %v242
    %364 = vmatprep.subr.mxu0 0.0
    %365 = vmatpush1.msra.mxu0 %v239
    %366 = vmatprep.subr.mxu0 0.0
    %367 = vmatpush1.msra.mxu0 %v236
    %368 = vmatprep.subr.mxu0 0.0
    %369 = vmatpush1.msra.mxu0 %v233
    %370 = vmatprep.subr.mxu0 0.0
    %371 = vmatpush1.msra.mxu0 %v230
    %372 = vmatprep.subr.mxu0 0.0
    %373 = vmatpush1.msra.mxu0 %v227
    %374 = vmatprep.subr.mxu0 0.0
    %375 = vmatpush1.msra.mxu0 %v224
    %376 = vmatprep.subr.mxu0 0.0
    %377 = vmatpush1.msra.mxu0 %v221
    %378 = vmatprep.subr.mxu0 0.0
    %379 = vmatpush1.msra.mxu0 %v218
    %380 = vmatprep.subr.mxu0 0.0
    %381 = vmatpush1.msra.mxu0 %v215
    %382 = vmatprep.subr.mxu0 0.0
    %383 = vmatpush2.msra.mxu0 0.0
    %384 = vmatprep.subr.mxu0 0.0
    %385 = vmatpush2.msra.mxu0 0.0
    %386 = vmatprep.subr.mxu0 0.0
    %387 = vmatpush2.msra.mxu0 0.0
    %388 = vmatprep.subr.mxu0 0.0
    %389 = vmatpush2.msra.mxu0 0.0
    %390 = vmatprep.subr.mxu0 0.0
    %391 = vmatpush2.msra.mxu0 0.0
    %392 = vmatprep.subr.mxu0 0.0
    %393 = vmatpush2.msra.mxu0 0.0
    %394 = vmatprep.subr.mxu0 0.0
    %395 = vmatpush2.msra.mxu0 0.0
    %396 = vmatprep.subr.mxu0 0.0
    %397 = vmatpush2.msra.mxu0 0.0
    %398 = vmatprep.subr.mxu0 0.0
    %399 = vmatpush2.msra.mxu0 0.0
    %400 = vmatprep.subr.mxu0 0.0
    %401 = vmatpush2.msra.mxu0 0.0
    %402 = vmatprep.subr.mxu0 0.0
    %403 = vmatpush2.msra.mxu0 0.0
    %404 = vmatprep.subr.mxu0 0.0
    %405 = vmatpush2.msra.mxu0 0.0
    %406 = vmatprep.subr.mxu0 0.0
    %407 = vmatpush2.msra.mxu0 0.0
    %408 = vmatprep.subr.mxu0 0.0
    %409 = vmatpush2.msra.mxu0 0.0
    %410 = vmatprep.subr.mxu0 0.0
    %411 = vmatpush2.msra.mxu0 0.0
    %412 = vmatprep.subr.mxu0 0.0
    %413 = vmatpush2.msra.mxu0 0.0
    %414 = vmatprep.mubr.f32.mxu0 0.0
    %415 = vmatmul.mubr.f32.gmra.mxu0 %v209
    %v416 = vpop.f32.mrf.mxu0
    %v417 = vadd.f32 0.0, %v416
    %v418 = vpop.f32.mrf.mxu0
    %419 = vmatprep.mubr.f32.mxu0 0.0
    %420 = vmatmul.mubr.f32.gmra.mxu0 %v210
    %v421 = vpop.f32.mrf.mxu0
    %v422 = vadd.f32 0.0, %v421
    %v423 = vpop.f32.mrf.mxu0
    %424 = vmatprep.mubr.f32.mxu0 0.0
    %425 = vmatmul.mubr.f32.gmra.mxu0 %v211
    %v426 = vpop.f32.mrf.mxu0
    %v427 = vadd.f32 0.0, %v426
    %v428 = vpop.f32.mrf.mxu0
    %429 = vmatprep.mubr.f32.mxu0 0.0
    %430 = vmatmul.mubr.f32.gmra.mxu0 %v212
    %v431 = vpop.f32.mrf.mxu0
    %v432 = vadd.f32 0.0, %v431
    %v433 = vpop.f32.mrf.mxu0
    %434 = vdwg.mxu0
    %v435 = vrot.slane %v330, 7
    %v436 = vrot.slane %v336, 7
    %v437 = vrot.slane %v342, 7
    %v438 = vrot.slane %v348, 7
    %v439 = vlaneseq
    %v440 = vshrl.u32 %v439, 7
    %vm441 = vcmp.lt.s32.totalorder %v440, 1
    %v442 = vsel %vm441, %v438, 0.0
    %v443 = vsel %vm441, %v437, %v438
    %v444 = vsel %vm441, 0.0, %v437
    %v445 = vsel %vm441, %v436, 0.0
    %v446 = vsel %vm441, %v435, %v436
    %v447 = vsel %vm441, 0.0, %v435
    %v448 = vadd.f32 %v328, %v447
    %v449 = vadd.f32 %v334, %v446
    %v450 = vadd.f32 %v445, 0.0
    %v451 = vadd.f32 %v340, %v444
    %v452 = vadd.f32 %v346, %v443
    %v453 = vadd.f32 %v442, 0.0
    %v454 = vrot.slane %v417, 6
    %v455 = vrot.slane %v422, 6
    %v456 = vrot.slane %v427, 6
    %v457 = vrot.slane %v432, 6
    %vm458 = vcmp.lt.s32.totalorder %v440, 2
    %v459 = vsel %vm458, %v457, 0.0
    %v460 = vsel %vm458, %v456, %v457
    %v461 = vsel %vm458, 0.0, %v456
    %v462 = vsel %vm458, %v455, 0.0
    %v463 = vsel %vm458, %v454, %v455
    %v464 = vsel %vm458, 0.0, %v454
    %v465 = vadd.f32 %v448, %v464
    %v466 = vadd.f32 %v449, %v463
    %v467 = vadd.f32 %v450, %v462
    %v468 = vadd.f32 %v451, %v461
    %v469 = vadd.f32 %v452, %v460
    %v470 = vadd.f32 %v453, %v459
    %v471 = vld [vmem:[%s5] sm:$0x1]
    %v473 = vlaneseq
    %v474 = vshrl.u32 %v473, 7
    %v475 = vsub.s32 0, %v474
    %v476 = vrot.slane %v471, %v475
    %v478 = vadd.f32 %v465, %v476
    %v479 = vadd.f32 %v466, %v476
    %v480 = vadd.f32 %v467, %v476
    %v481 = vadd.f32 %v468, %v476
    %v482 = vadd.f32 %v469, %v476
    %v483 = vadd.f32 %v470, %v476
    %v484 = vmax.f32 %v478, 0.0
    %v485 = vmax.f32 %v479, 0.0
    %v486 = vmax.f32 %v480, 0.0
    %v487 = vmax.f32 %v481, 0.0
    %v488 = vmax.f32 %v482, 0.0
    %v489 = vmax.f32 %v483, 0.0
    %v490 = vld [vmem:[#allocation10] sm:$0xff]
    %v491 = vld [vmem:[#allocation10 + $0x8] sm:$0xff]
    %v492 = vld [vmem:[#allocation10 + $0x10] sm:$0xff]
    %v493 = vld [vmem:[#allocation10 + $0x18] sm:$0xff]
    %v494 = vld [vmem:[#allocation10 + $0x20] sm:$0xff]
    %v495 = vld [vmem:[#allocation10 + $0x28] sm:$0xff]
    %v496 = vld [vmem:[#allocation10 + $0x30] sm:$0xff]
    %v497 = vld [vmem:[#allocation10 + $0x38] sm:$0xff]
    %v498 = vld [vmem:[#allocation10 + $0x40] sm:$0xff]
    %v499 = vld [vmem:[#allocation10 + $0x48] sm:$0xff]
    %v500 = vld [vmem:[#allocation10 + $0x50] sm:$0xff]
    %v501 = vld [vmem:[#allocation10 + $0x58] sm:$0xff]
    %v502 = vld [vmem:[#allocation10 + $0x60] sm:$0xff]
    %v503 = vld [vmem:[#allocation10 + $0x68] sm:$0xff]
    %v504 = vld [vmem:[#allocation10 + $0x70] sm:$0xff]
    %v505 = vld [vmem:[#allocation10 + $0x78] sm:$0xff]
    %v506 = vld [vmem:[%s7] sm:$0x1]
    %v508 = vlaneseq
    %v509 = vshrl.u32 %v508, 7
    %v510 = vsub.s32 0, %v509
    %v511 = vrot.slane %v506, %v510
    %513 = vmatprep.subr.mxu0 0.0
    %514 = vmatpush1.msra.mxu0 %v505
    %515 = vmatprep.subr.mxu0 0.0
    %516 = vmatpush1.msra.mxu0 %v504
    %517 = vmatprep.subr.mxu0 0.0
    %518 = vmatpush1.msra.mxu0 %v503
    %519 = vmatprep.subr.mxu0 0.0
    %520 = vmatpush1.msra.mxu0 %v502
    %521 = vmatprep.subr.mxu0 0.0
    %522 = vmatpush1.msra.mxu0 %v501
    %523 = vmatprep.subr.mxu0 0.0
    %524 = vmatpush1.msra.mxu0 %v500
    %525 = vmatprep.subr.mxu0 0.0
    %526 = vmatpush1.msra.mxu0 %v499
    %527 = vmatprep.subr.mxu0 0.0
    %528 = vmatpush1.msra.mxu0 %v498
    %529 = vmatprep.subr.mxu0 0.0
    %530 = vmatpush1.msra.mxu0 %v497
    %531 = vmatprep.subr.mxu0 0.0
    %532 = vmatpush1.msra.mxu0 %v496
    %533 = vmatprep.subr.mxu0 0.0
    %534 = vmatpush1.msra.mxu0 %v495
    %535 = vmatprep.subr.mxu0 0.0
    %536 = vmatpush1.msra.mxu0 %v494
    %537 = vmatprep.subr.mxu0 0.0
    %538 = vmatpush1.msra.mxu0 %v493
    %539 = vmatprep.subr.mxu0 0.0
    %540 = vmatpush1.msra.mxu0 %v492
    %541 = vmatprep.subr.mxu0 0.0
    %542 = vmatpush1.msra.mxu0 %v491
    %543 = vmatprep.subr.mxu0 0.0
    %544 = vmatpush1.msra.mxu0 %v490
    %545 = vmatprep.subr.mxu0 0.0
    %546 = vmatpush2.msra.mxu0 0.0
    %547 = vmatprep.subr.mxu0 0.0
    %548 = vmatpush2.msra.mxu0 0.0
    %549 = vmatprep.subr.mxu0 0.0
    %550 = vmatpush2.msra.mxu0 0.0
    %551 = vmatprep.subr.mxu0 0.0
    %552 = vmatpush2.msra.mxu0 0.0
    %553 = vmatprep.subr.mxu0 0.0
    %554 = vmatpush2.msra.mxu0 0.0
    %555 = vmatprep.subr.mxu0 0.0
    %556 = vmatpush2.msra.mxu0 0.0
    %557 = vmatprep.subr.mxu0 0.0
    %558 = vmatpush2.msra.mxu0 0.0
    %559 = vmatprep.subr.mxu0 0.0
    %560 = vmatpush2.msra.mxu0 0.0
    %561 = vmatprep.subr.mxu0 0.0
    %562 = vmatpush2.msra.mxu0 0.0
    %563 = vmatprep.subr.mxu0 0.0
    %564 = vmatpush2.msra.mxu0 0.0
    %565 = vmatprep.subr.mxu0 0.0
    %566 = vmatpush2.msra.mxu0 0.0
    %567 = vmatprep.subr.mxu0 0.0
    %568 = vmatpush2.msra.mxu0 0.0
    %569 = vmatprep.subr.mxu0 0.0
    %570 = vmatpush2.msra.mxu0 0.0
    %571 = vmatprep.subr.mxu0 0.0
    %572 = vmatpush2.msra.mxu0 0.0
    %573 = vmatprep.subr.mxu0 0.0
    %574 = vmatpush2.msra.mxu0 0.0
    %575 = vmatprep.subr.mxu0 0.0
    %576 = vmatpush2.msra.mxu0 0.0
    %577 = vmatprep.mubr.f32.mxu0 0.0
    %578 = vmatmul.mubr.f32.gmra.mxu0 %v484
    %v579 = vpop.f32.mrf.mxu0
    %v580 = vadd.f32 %v511, %v579
    %v581 = vpop.f32.mrf.mxu0
    %582 = vmatprep.mubr.f32.mxu0 0.0
    %583 = vmatmul.mubr.f32.gmra.mxu0 %v485
    %v584 = vpop.f32.mrf.mxu0
    %v585 = vadd.f32 %v511, %v584
    %v586 = vpop.f32.mrf.mxu0
    %587 = vmatprep.mubr.f32.mxu0 0.0
    %588 = vmatmul.mubr.f32.gmra.mxu0 %v486
    %v589 = vpop.f32.mrf.mxu0
    %v590 = vadd.f32 %v511, %v589
    %v591 = vpop.f32.mrf.mxu0
    %592 = vmatprep.mubr.f32.mxu0 0.0
    %593 = vmatmul.mubr.f32.gmra.mxu0 %v487
    %v594 = vpop.f32.mrf.mxu0
    %v595 = vadd.f32 %v511, %v594
    %v596 = vpop.f32.mrf.mxu0
    %597 = vmatprep.mubr.f32.mxu0 0.0
    %598 = vmatmul.mubr.f32.gmra.mxu0 %v488
    %v599 = vpop.f32.mrf.mxu0
    %v600 = vadd.f32 %v511, %v599
    %v601 = vpop.f32.mrf.mxu0
    %602 = vmatprep.mubr.f32.mxu0 0.0
    %603 = vmatmul.mubr.f32.gmra.mxu0 %v489
    %v604 = vpop.f32.mrf.mxu0
    %v605 = vadd.f32 %v511, %v604
    %v606 = vpop.f32.mrf.mxu0
    %607 = vdwg.mxu0
    %v608 = vld [vmem:[#allocation5] sm:$0x1]
    %v609 = vld [vmem:[#allocation5 + $0x1] sm:$0x1]
    %v612 = vlaneseq
    %v613 = vshrl.u32 %v612, 7
    %v614 = vsub.s32 0, %v613
    %v615 = vrot.slane %v608, %v614
    %v616 = vlaneseq
    %v617 = vshrl.u32 %v616, 7
    %v618 = vsub.s32 0, %v617
    %v619 = vrot.slane %v609, %v618
    %v622 = vadd.f32 %v580, %v615
    %v623 = vadd.f32 %v585, %v615
    %v624 = vadd.f32 %v590, %v615
    %v625 = vadd.f32 %v595, %v619
    %v626 = vadd.f32 %v600, %v619
    %v627 = vadd.f32 %v605, %v619
    %v628 = vmax.f32 %v622, 0.0
    %v629 = vmax.f32 %v623, 0.0
    %v630 = vmax.f32 %v624, 0.0
    %v631 = vmax.f32 %v625, 0.0
    %v632 = vmax.f32 %v626, 0.0
    %v633 = vmax.f32 %v627, 0.0
    %634 = vst [vmem:[#allocation11] sm:$0xff] %v628
    %635 = vst [vmem:[#allocation11 + $0x8] sm:$0xff] %v629
    %636 = vst [vmem:[#allocation11 + $0x10] sm:$0xff] %v630
    %637 = vst [vmem:[#allocation11 + $0x18] sm:$0xff] %v631
    %638 = vst [vmem:[#allocation11 + $0x20] sm:$0xff] %v632
    %639 = vst [vmem:[#allocation11 + $0x28] sm:$0xff] %v633
    // Predicated region
    $region54: #{tpu_custom_call.1} parent=1 // pred_check
      _
    $region55: #{tpu_custom_call.1} parent=1 // pred_check_branch
      %641 = sbr.rel (0) target = $region57
    $region56: #{tpu_custom_call.1} parent=1 // pred_region
      %s643 = ssub.s32 768, 768
      %644 = vsyncadd [#allocation4], %s643
      %s645 = sshll.u32 [#allocation11], 4
      %s646 = int_to_ptr.vmem [resolvable:$true] %s645
      %651 = dma.vmem_to_hbm [thread:$0]  %s646, 768, %s8, [#allocation4], 128, 128, 8
    $region57: #{tpu_custom_call.1} parent=1 // pred_fallthru
      _
    // Predicated region
    $region58: #{tpu_custom_call.1} parent=1 // pred_check
      _
    $region59: #{tpu_custom_call.1} parent=1 // pred_check_branch
      %653 = sbr.rel (0) target = $region61
    $region60: #{tpu_custom_call.1} parent=1 // pred_region
      %654 = dma.done [#allocation4], 768
    $region61: #{tpu_custom_call.1} parent=1 // pred_fallthru
      _
    %655 = vsyncpa [#allocation3], 1
    %656 = vsyncpa [#allocation6], 1
    %657 = vsyncpa [#allocation9], 1
    %658 = vsyncpa [#allocation4], 1

</llo_original>
